<compile_context>
chip_gen: v7x
topology: tpu7x:2x2x1
jax: 0.10.0
libtpu: 0.0.40
codegen_flags: <defaults>
</compile_context>

<pallas_src>
import jax
import jax.numpy as jnp
from jax.experimental import pallas as pl
from jax.experimental.pallas import tpu as pltpu


def _att_kernel(x_ref, w1t_ref, b1_ref, w2_ref, w3t_ref, b3_ref, o_ref):
    # Per grid step (Bt batch elements):
    #   x_ref   : [Bt, S, H]   input dtype (f32 or bf16)
    #   w1t_ref : [H, H]       fc1 weight, pre-transposed ([in, out]), bf16
    #   b1_ref  : [1, H]       f32
    #   w2_ref  : [1, H]       fc2 weight row (out_dim == 1), f32
    #   w3t_ref : [H, 2H]      final linear weight, pre-transposed, bf16
    #   b3_ref  : [1, 2H]      f32
    #   o_ref   : [Bt, 2H]
    Bt, S, H = x_ref.shape

    x = x_ref[...]
    x_f32 = x.astype(jnp.float32)

    # --- MLP.fc1: Linear(H, H) + ReLU --------------------------------------
    # Merge (Bt, S) -> rows: one MXU matmul with a full M dimension.
    x2 = x.reshape(Bt * S, H).astype(jnp.bfloat16)
    h = jnp.dot(x2, w1t_ref[...], preferred_element_type=jnp.float32)   # [Bt*S, H]
    h = h.reshape(Bt, S, H)
    h = jnp.maximum(h + b1_ref[...], 0.0)
    # TODO(synk): training-mode dropout (p=0.1) not implemented; eval-mode identity.

    # --- MLP.fc2: Linear(H, 1) as a lane reduction (out_dim == 1) ----------
    # (fc2 bias omitted: constant over S, cancels exactly in the softmax.)
    logits = jnp.sum(h * w2_ref[...], axis=-1, keepdims=True)           # [Bt, S, 1]

    # --- softmax over the sequence axis (dim=1) -----------------------------
    m = jnp.max(logits, axis=1, keepdims=True)                          # [Bt, 1, 1]
    e = jnp.exp(logits - m)
    att = e / jnp.sum(e, axis=1, keepdims=True)                         # exact

    # --- attention-weighted sum over S: [Bt, H] -----------------------------
    x_atted = jnp.sum(att * x_f32, axis=1)

    # --- final Linear(H, 2H) -------------------------------------------------
    y = jnp.dot(x_atted.astype(jnp.bfloat16), w3t_ref[...],
                preferred_element_type=jnp.float32)                     # [Bt, 2H]
    o_ref[...] = (y + b3_ref[...]).astype(o_ref.dtype)


def _pick_block_b(B, S, H, itemsize, max_tile_bytes=2 << 20):
    """Largest batch-tile Bt such that:
       * Bt divides B,
       * Bt % 8 == 0 (sublane-dense (Bt, 2H) output stores),
       * the x tile stays <= max_tile_bytes (fits v5e's 16 MiB default scoped
         VMEM with double-buffering and leaves headroom on v7x's 64 MiB VMEM),
       * the grid keeps >= 2 steps so v7x's two TensorCores both get work.
       Falls back to the whole batch (always a legal full-dim block)."""
    best = B
    for d in range(1, B):
        if B % d or d % 8:
            continue
        if d * S * H * itemsize > max_tile_bytes:
            continue
        if B // d >= 2:
            best = d
    return best


def att_forward(x, params, *, training=False, block_b=None):
    """Forward pass of `Att` (eval mode).

    x:      [B, S, H]  (f32 or bf16)
    params: dict prepared once by `init_att_params` (pre-transposed weights,
            matmul weights in bf16):
            w1t [H, H] bf16, b1 [1, H] f32, w2 [1, H] f32,
            w3t [H, 2H] bf16, b3 [1, 2H] f32
    """
    del training  # TODO(synk): training-mode dropout not implemented (inference identity).
    B, S, H = x.shape
    w1t, b1 = params["w1t"], params["b1"]
    w2 = params["w2"]
    w3t, b3 = params["w3t"], params["b3"]
    out_hid = w3t.shape[1]

    bt = block_b if block_b is not None else _pick_block_b(B, S, H, x.dtype.itemsize)
    assert B % bt == 0, f"block_b={bt} must divide batch={B}"
    grid = (B // bt,)

    flops = B * (2 * S * H * H + 4 * S * H + 2 * H * out_hid)
    bytes_accessed = (x.size * x.dtype.itemsize
                      + sum(p.size * p.dtype.itemsize for p in (w1t, b1, w2, w3t, b3))
                      + B * out_hid * x.dtype.itemsize)
    cost = pl.CostEstimate(flops=flops, transcendentals=B * S,
                           bytes_accessed=bytes_accessed)

    out = pl.pallas_call(
        _att_kernel,
        out_shape=jax.ShapeDtypeStruct((B, out_hid), x.dtype),
        grid=grid,
        in_specs=[
            pl.BlockSpec((bt, S, H), lambda i: (i, 0, 0)),     # x: Bt batches per step
            pl.BlockSpec((H, H), lambda i: (0, 0)),            # w1t (resident)
            pl.BlockSpec((1, H), lambda i: (0, 0)),            # b1
            pl.BlockSpec((1, H), lambda i: (0, 0)),            # w2
            pl.BlockSpec((H, out_hid), lambda i: (0, 0)),      # w3t (resident)
            pl.BlockSpec((1, out_hid), lambda i: (0, 0)),      # b3
        ],
        out_specs=pl.BlockSpec((bt, out_hid), lambda i: (i, 0)),
        compiler_params=pltpu.CompilerParams(
            dimension_semantics=("parallel",)),                # batch tiles -> both v7x TCs
        cost_estimate=cost,
    )(x, w1t, b1, w2, w3t, b3)

    return out


def init_att_params(key, num_hid=128, out_dim=1, matmul_dtype=jnp.bfloat16):
    """PyTorch-nn.Linear-style init (U(-1/sqrt(in), 1/sqrt(in))), stored once
    in kernel-friendly layout: matmul weights pre-transposed ([in, out]) and
    cast to bf16; vector-unit operands (biases, fc2 row) kept in f32.
    fc2's bias is not materialized: it cancels exactly through the softmax."""
    if out_dim != 1:
        raise NotImplementedError("Att Pallas kernel supports out_dim == 1 "
                                  "(the module default).")
    k1w, k1b, k2w, _, k3w, k3b = jax.random.split(key, 6)
    bound = 1.0 / (num_hid ** 0.5)  # all three Linears have in_features = num_hid

    def u(k, shape):
        return jax.random.uniform(k, shape, jnp.float32, minval=-bound, maxval=bound)

    return {
        "w1t": u(k1w, (num_hid, num_hid)).astype(matmul_dtype),      # fc1.weight^T
        "b1":  u(k1b, (1, num_hid)),
        "w2":  u(k2w, (1, num_hid)),                                  # fc2.weight row
        "w3t": u(k3w, (num_hid, 2 * num_hid)).astype(matmul_dtype),   # linear.weight^T
        "b3":  u(k3b, (1, 2 * num_hid)),
    }


def att_reference(x, params):
    """Pure-JAX f32 reference of Att.forward (eval mode), sharing the same
    (bf16-stored) weights so only activation rounding differs."""
    w1t = params["w1t"].astype(jnp.float32)
    w3t = params["w3t"].astype(jnp.float32)
    h = jnp.maximum(x @ w1t + params["b1"], 0.0)                 # [B, S, H]
    logits = jnp.sum(h * params["w2"], axis=-1, keepdims=True)   # [B, S, 1] (fc2 bias cancels)
    att = jax.nn.softmax(logits, axis=1)                         # softmax over S
    x_atted = jnp.sum(att * x, axis=1)                           # [B, H]
    return x_atted @ w3t + params["b3"]                          # [B, 2H]


if __name__ == "__main__":
    key = jax.random.PRNGKey(0)
    k_x, k_p = jax.random.split(key)

    batch, seq, num_hid = 16, 16, 128   # small, lane/sublane-aligned demo shapes
    x = jax.random.normal(k_x, (batch, seq, num_hid), jnp.float32)
    params = init_att_params(k_p, num_hid=num_hid, out_dim=1)

    out = att_forward(x, params)        # auto-picks Bt=8 -> grid=(2,)
    out = jax.block_until_ready(out)
    assert out.shape == (batch, 2 * num_hid)

    ref = att_reference(x, params)
    err = float(jnp.max(jnp.abs(out - ref)))
    # Tolerance accounts for bf16 MXU operands (f32 accumulation) in the kernel.
    assert jnp.allclose(out, ref, atol=2e-2, rtol=2e-2), (
        "Att kernel mismatch, max abs err = %e" % err)

    print("KERNEL_OK")
</pallas_src>

<mosaic_0001>
module attributes {stable_mosaic.version = 11 : i64} {
  func.func @_att_kernel(%arg0: i32, %arg1: memref<8x16x128xf32, #tpu.memory_space<vmem>>, %arg2: memref<128x128xbf16, #tpu.memory_space<vmem>>, %arg3: memref<1x128xf32, #tpu.memory_space<vmem>>, %arg4: memref<1x128xf32, #tpu.memory_space<vmem>>, %arg5: memref<128x256xbf16, #tpu.memory_space<vmem>>, %arg6: memref<1x256xf32, #tpu.memory_space<vmem>>, %arg7: memref<8x256xf32, #tpu.memory_space<vmem>>) attributes {dimension_semantics = [#tpu.dimension_semantics<parallel>], iteration_bounds = array<i64: 2>, scalar_prefetch = 0 : i64, scratch_operands = 0 : i64, tpu.core_type = #tpu.core_type<tc>, window_params = [{transform_indices = @transform_0, window_bounds = array<i64: 8, 16, 128>}, {pipeline_mode = #tpu.pipeline_mode<synchronous>, transform_indices = @transform_1, window_bounds = array<i64: 128, 128>}, {pipeline_mode = #tpu.pipeline_mode<synchronous>, transform_indices = @transform_2, window_bounds = array<i64: 1, 128>}, {pipeline_mode = #tpu.pipeline_mode<synchronous>, transform_indices = @transform_3, window_bounds = array<i64: 1, 128>}, {pipeline_mode = #tpu.pipeline_mode<synchronous>, transform_indices = @transform_4, window_bounds = array<i64: 128, 256>}, {pipeline_mode = #tpu.pipeline_mode<synchronous>, transform_indices = @transform_5, window_bounds = array<i64: 1, 256>}, {transform_indices = @transform_6, window_bounds = array<i64: 8, 256>}]} {
    %c0 = arith.constant 0 : index
    %c0_0 = arith.constant 0 : index
    %c0_1 = arith.constant 0 : index
    %0 = vector.load %arg1[%c0, %c0_0, %c0_1] : memref<8x16x128xf32, #tpu.memory_space<vmem>>, vector<8x16x128xf32>
    %1 = vector.shape_cast %0 : vector<8x16x128xf32> to vector<128x128xf32>
    %2 = arith.truncf %1 : vector<128x128xf32> to vector<128x128xbf16>
    %c0_2 = arith.constant 0 : index
    %c0_3 = arith.constant 0 : index
    %3 = vector.load %arg2[%c0_2, %c0_3] : memref<128x128xbf16, #tpu.memory_space<vmem>>, vector<128x128xbf16>
    %cst = arith.constant dense<0.000000e+00> : vector<128x128xf32>
    %4 = tpu.matmul %2, %3, %cst {dimension_numbers = #tpu.dot_dimension_numbers<[1], [0], [0], [1], [0, 0, 1, 1], [], []>} : vector<128x128xbf16>, vector<128x128xbf16>, vector<128x128xf32> -> vector<128x128xf32>
    %5 = vector.shape_cast %4 : vector<128x128xf32> to vector<8x16x128xf32>
    %c0_4 = arith.constant 0 : index
    %c0_5 = arith.constant 0 : index
    %6 = vector.load %arg3[%c0_4, %c0_5] : memref<1x128xf32, #tpu.memory_space<vmem>>, vector<1x128xf32>
    %7 = vector.shape_cast %6 : vector<1x128xf32> to vector<1x1x128xf32>
    %8 = vector.broadcast %7 : vector<1x1x128xf32> to vector<8x16x128xf32>
    %9 = arith.addf %5, %8 : vector<8x16x128xf32>
    %cst_6 = arith.constant 0.000000e+00 : f32
    %10 = vector.broadcast %cst_6 : f32 to vector<8x16x128xf32>
    %11 = arith.maximumf %9, %10 : vector<8x16x128xf32>
    %c0_7 = arith.constant 0 : index
    %c0_8 = arith.constant 0 : index
    %12 = vector.load %arg4[%c0_7, %c0_8] : memref<1x128xf32, #tpu.memory_space<vmem>>, vector<1x128xf32>
    %13 = vector.shape_cast %12 : vector<1x128xf32> to vector<1x1x128xf32>
    %14 = vector.broadcast %13 : vector<1x1x128xf32> to vector<8x16x128xf32>
    %15 = arith.mulf %11, %14 : vector<8x16x128xf32>
    %cst_9 = arith.constant dense<0.000000e+00> : vector<8x16xf32>
    %16 = vector.multi_reduction <add>, %15, %cst_9 [2] : vector<8x16x128xf32> to vector<8x16xf32>
    %17 = vector.shape_cast %16 : vector<8x16xf32> to vector<8x16x1xf32>
    %cst_10 = arith.constant dense<0xFF800000> : vector<8x1xf32>
    %18 = vector.multi_reduction <maximumf>, %17, %cst_10 [1] : vector<8x16x1xf32> to vector<8x1xf32>
    %19 = vector.shape_cast %18 : vector<8x1xf32> to vector<8x1x1xf32>
    %20 = vector.broadcast %19 : vector<8x1x1xf32> to vector<8x16x1xf32>
    %21 = arith.subf %17, %20 : vector<8x16x1xf32>
    %22 = math.exp %21 : vector<8x16x1xf32>
    %cst_11 = arith.constant dense<0.000000e+00> : vector<8x1xf32>
    %23 = vector.multi_reduction <add>, %22, %cst_11 [1] : vector<8x16x1xf32> to vector<8x1xf32>
    %24 = vector.shape_cast %23 : vector<8x1xf32> to vector<8x1x1xf32>
    %25 = vector.broadcast %24 : vector<8x1x1xf32> to vector<8x16x1xf32>
    %26 = arith.divf %22, %25 : vector<8x16x1xf32>
    %27 = vector.broadcast %26 : vector<8x16x1xf32> to vector<8x16x128xf32>
    %28 = arith.mulf %27, %0 : vector<8x16x128xf32>
    %cst_12 = arith.constant dense<0.000000e+00> : vector<8x128xf32>
    %29 = vector.multi_reduction <add>, %28, %cst_12 [1] : vector<8x16x128xf32> to vector<8x128xf32>
    %30 = arith.truncf %29 : vector<8x128xf32> to vector<8x128xbf16>
    %c0_13 = arith.constant 0 : index
    %c0_14 = arith.constant 0 : index
    %31 = vector.load %arg5[%c0_13, %c0_14] : memref<128x256xbf16, #tpu.memory_space<vmem>>, vector<128x256xbf16>
    %cst_15 = arith.constant dense<0.000000e+00> : vector<8x256xf32>
    %32 = tpu.matmul %30, %31, %cst_15 {dimension_numbers = #tpu.dot_dimension_numbers<[1], [0], [0], [1], [0, 0, 1, 1], [], []>} : vector<8x128xbf16>, vector<128x256xbf16>, vector<8x256xf32> -> vector<8x256xf32>
    %c0_16 = arith.constant 0 : index
    %c0_17 = arith.constant 0 : index
    %33 = vector.load %arg6[%c0_16, %c0_17] : memref<1x256xf32, #tpu.memory_space<vmem>>, vector<1x256xf32>
    %34 = vector.broadcast %33 : vector<1x256xf32> to vector<8x256xf32>
    %35 = arith.addf %32, %34 : vector<8x256xf32>
    %c0_18 = arith.constant 0 : index
    %c0_19 = arith.constant 0 : index
    %36 = vector.load %arg7[%c0_18, %c0_19] : memref<8x256xf32, #tpu.memory_space<vmem>>, vector<8x256xf32>
    tpu.vector_store %arg7[%c0_18, %c0_19], %35 {strides = array<i32>} : memref<8x256xf32, #tpu.memory_space<vmem>>, vector<8x256xf32>,
    return
  }
  func.func @transform_0(%arg0: i32) -> (i32, i32, i32) {
    %c0_i32 = arith.constant 0 : i32
    %c0_i32_0 = arith.constant 0 : i32
    %c0_i32_1 = arith.constant 0 : i32
    return %arg0, %c0_i32, %c0_i32_0 : i32, i32, i32
  }
  func.func @transform_1(%arg0: i32) -> (i32, i32) {
    %c0_i32 = arith.constant 0 : i32
    %c0_i32_0 = arith.constant 0 : i32
    %c0_i32_1 = arith.constant 0 : i32
    return %c0_i32, %c0_i32_0 : i32, i32
  }
  func.func @transform_2(%arg0: i32) -> (i32, i32) {
    %c0_i32 = arith.constant 0 : i32
    %c0_i32_0 = arith.constant 0 : i32
    %c0_i32_1 = arith.constant 0 : i32
    return %c0_i32, %c0_i32_0 : i32, i32
  }
  func.func @transform_3(%arg0: i32) -> (i32, i32) {
    %c0_i32 = arith.constant 0 : i32
    %c0_i32_0 = arith.constant 0 : i32
    %c0_i32_1 = arith.constant 0 : i32
    return %c0_i32, %c0_i32_0 : i32, i32
  }
  func.func @transform_4(%arg0: i32) -> (i32, i32) {
    %c0_i32 = arith.constant 0 : i32
    %c0_i32_0 = arith.constant 0 : i32
    %c0_i32_1 = arith.constant 0 : i32
    return %c0_i32, %c0_i32_0 : i32, i32
  }
  func.func @transform_5(%arg0: i32) -> (i32, i32) {
    %c0_i32 = arith.constant 0 : i32
    %c0_i32_0 = arith.constant 0 : i32
    %c0_i32_1 = arith.constant 0 : i32
    return %c0_i32, %c0_i32_0 : i32, i32
  }
  func.func @transform_6(%arg0: i32) -> (i32, i32) {
    %c0_i32 = arith.constant 0 : i32
    %c0_i32_0 = arith.constant 0 : i32
    return %arg0, %c0_i32 : i32, i32
  }
}

</mosaic_0001>

<llo_original>
// kernel: tpu_custom_call.1
$region0: #{tpu_custom_call.1}
  #allocation0 [shape = 'u32[]', space=smem, size = 0x4, offset = 0x4, fixed_abs, tag = 'smem constant byte address 0x4 - core index']
  #allocation1 [shape = 'u32[144,128]{1,0:T(1,128)}', space=vmem, size = 0x12000, scoped, tag = 'internal scratch']
  %s0 = inlined_call_operand.hbm [shape: f32[16,16,128], index: 0, kind: input, shape index: {}]
  %s1 = inlined_call_operand.hbm [shape: bf16[128,128], index: 1, kind: input, shape index: {}]
  %s2 = inlined_call_operand.vmem [shape: f32[1,128], index: 2, kind: input, shape index: {}]
  %s3 = inlined_call_operand.vmem [shape: f32[1,128], index: 3, kind: input, shape index: {}]
  %s4 = inlined_call_operand.hbm [shape: bf16[128,256], index: 4, kind: input, shape index: {}]
  %s5 = inlined_call_operand.vmem [shape: f32[1,256], index: 5, kind: input, shape index: {}]
  %s6 = inlined_call_operand.hbm [shape: f32[16,256], index: 6, kind: output, shape index: {}]
  %s7 = sld [smem:[#allocation0]]
  $region69: #{tpu_custom_call.1} parent=0
    _
  %s9 = ssub.s32 1, %s7
  %s10 = scalar_select 0, %s9, %s7
  $region1: #{tpu_custom_call.1} parent=0
    #allocation2 [shape = 'u8[131072]{0}', space=vmem, size = 0x20000, scoped, tag = 'input window, operand 0']
    #allocation3 [shape = 's32[2]{0}', space=sflag, size = 0x8, scoped, tag = 'scoped memory for tpu_custom_call.1']
    #allocation4 [shape = 's32[2]{0}', space=sflag, size = 0x8, scoped, tag = 'scoped memory for tpu_custom_call.1']
    #allocation5 [shape = 'u8[32768]{0}', space=vmem, size = 0x8000, scoped, tag = 'input window, operand 1, single buffered']
    #allocation6 [shape = 's32[1]{0}', space=sflag, size = 0x4, scoped, tag = 'scoped memory for tpu_custom_call.1']
    #allocation7 [shape = 'u8[65536]{0}', space=vmem, size = 0x10000, scoped, tag = 'input window, operand 4, single buffered']
    #allocation8 [shape = 'u8[16384]{0}', space=vmem, size = 0x4000, scoped, tag = 'output window, operand 0']
    %11 = vsyncpa [#allocation3], 0
    %s12 = scalar_lea.sflag [#allocation3], 1
    %13 = vsyncpa %s12, 0
    %14 = vsyncpa [#allocation6], 0
    %15 = vsyncpa [#allocation4], 0
    %s16 = scalar_lea.sflag [#allocation4], 1
    %17 = vsyncpa %s16, 0
    loop: start=0, step=1, limit=4
    $region2: #{tpu_custom_call.1} parent=1 // loop_pre_header
      _
    $region3: #{tpu_custom_call.1} parent=1 // loop_header
      %s19 = sphi 0, %s23
      %p20 = scmp.ge.s32.totalorder %s19, 4
      %s29 = sphi 0, %s31
      %s32 = sphi 0, %s29
      %s33 = sphi 0, %s32
      %s49 = sphi 0, %s33
      %s53 = sphi 0, %s53
      %s55 = sphi 0, %s53
      %s56 = sphi 0, %s55
      %s70 = sphi 0, %s56
      %s74 = sphi 0, %s74
      %s76 = sphi 0, %s74
      %s77 = sphi 0, %s76
      %s91 = sphi 0, %s77
      %s95 = sphi 0, %s95
      %s97 = sphi 0, %s95
      %s98 = sphi 0, %s97
      %s112 = sphi 0, %s98
      %s116 = sphi 0, %s116
      %s118 = sphi 0, %s116
      %s119 = sphi 0, %s118
      %s133 = sphi 0, %s119
      %s137 = sphi 0, %s137
      %s139 = sphi 0, %s137
      %s140 = sphi 0, %s139
      %s154 = sphi 0, %s140
      %s160 = sphi 0, %s162
      %s163 = sphi 0, %s160
      %s164 = sphi 0, %s163
      %s180 = sphi 0, %s164
    $region4: #{tpu_custom_call.1} parent=1 // loop_header_branch
      %22 = sbr.rel (%p20) target = $region8
    $region5: #{tpu_custom_call.1} parent=1 // loop_body
      %s24 = ssub.s32 %s19, 1
      %s25 = ssub.s32 %s19, 2
      %s26 = sadd.s32 %s19, 1
      %s27 = ssub.s32 %s19, %s26
      %p28 = scmp.eq.s32.totalorder %s27, 0
      %s30 = sadd.s32 %s29, 1
      %s31 = scalar_select %p28, %s29, %s30
      %p34 = pneg %p28
      %p35 = scmp.eq.s32.totalorder %s19, 1
      %p36 = por %p34, %p35
      %p37 = scmp.ne.s32.totalorder %s29, %s32
      %p38 = scmp.eq.s32.totalorder %s19, 0
      %p39 = por %p37, %p38
      %p40 = scmp.ne.s32.totalorder %s29, %s32
      %p41 = scmp.eq.s32.totalorder %s24, 1
      %p42 = por %p40, %p41
      %p43 = scmp.ne.s32.totalorder %s32, %s33
      %p44 = scmp.eq.s32.totalorder %s24, 0
      %p45 = por %p43, %p44
      %p46 = scmp.ne.s32.totalorder %s32, %s33
      %p47 = scmp.eq.s32.totalorder %s25, 1
      %p48 = por %p46, %p47
      %p50 = scmp.ne.s32.totalorder %s33, %s49
      %p51 = scmp.eq.s32.totalorder %s25, 0
      %p52 = por %p50, %p51
      %s54 = sadd.s32 %s53, 1
      %p57 = scmp.eq.s32.totalorder %s19, 1
      %p58 = scmp.ne.s32.totalorder %s53, %s55
      %p59 = scmp.eq.s32.totalorder %s19, 0
      %p60 = por %p58, %p59
      %p61 = scmp.ne.s32.totalorder %s53, %s55
      %p62 = scmp.eq.s32.totalorder %s24, 1
      %p63 = por %p61, %p62
      %p64 = scmp.ne.s32.totalorder %s55, %s56
      %p65 = scmp.eq.s32.totalorder %s24, 0
      %p66 = por %p64, %p65
      %p67 = scmp.ne.s32.totalorder %s55, %s56
      %p68 = scmp.eq.s32.totalorder %s25, 1
      %p69 = por %p67, %p68
      %p71 = scmp.ne.s32.totalorder %s56, %s70
      %p72 = scmp.eq.s32.totalorder %s25, 0
      %p73 = por %p71, %p72
      %s75 = sadd.s32 %s74, 1
      %p78 = scmp.eq.s32.totalorder %s19, 1
      %p79 = scmp.ne.s32.totalorder %s74, %s76
      %p80 = scmp.eq.s32.totalorder %s19, 0
      %p81 = por %p79, %p80
      %p82 = scmp.ne.s32.totalorder %s74, %s76
      %p83 = scmp.eq.s32.totalorder %s24, 1
      %p84 = por %p82, %p83
      %p85 = scmp.ne.s32.totalorder %s76, %s77
      %p86 = scmp.eq.s32.totalorder %s24, 0
      %p87 = por %p85, %p86
      %p88 = scmp.ne.s32.totalorder %s76, %s77
      %p89 = scmp.eq.s32.totalorder %s25, 1
      %p90 = por %p88, %p89
      %p92 = scmp.ne.s32.totalorder %s77, %s91
      %p93 = scmp.eq.s32.totalorder %s25, 0
      %p94 = por %p92, %p93
      %s96 = sadd.s32 %s95, 1
      %p99 = scmp.eq.s32.totalorder %s19, 1
      %p100 = scmp.ne.s32.totalorder %s95, %s97
      %p101 = scmp.eq.s32.totalorder %s19, 0
      %p102 = por %p100, %p101
      %p103 = scmp.ne.s32.totalorder %s95, %s97
      %p104 = scmp.eq.s32.totalorder %s24, 1
      %p105 = por %p103, %p104
      %p106 = scmp.ne.s32.totalorder %s97, %s98
      %p107 = scmp.eq.s32.totalorder %s24, 0
      %p108 = por %p106, %p107
      %p109 = scmp.ne.s32.totalorder %s97, %s98
      %p110 = scmp.eq.s32.totalorder %s25, 1
      %p111 = por %p109, %p110
      %p113 = scmp.ne.s32.totalorder %s98, %s112
      %p114 = scmp.eq.s32.totalorder %s25, 0
      %p115 = por %p113, %p114
      %s117 = sadd.s32 %s116, 1
      %p120 = scmp.eq.s32.totalorder %s19, 1
      %p121 = scmp.ne.s32.totalorder %s116, %s118
      %p122 = scmp.eq.s32.totalorder %s19, 0
      %p123 = por %p121, %p122
      %p124 = scmp.ne.s32.totalorder %s116, %s118
      %p125 = scmp.eq.s32.totalorder %s24, 1
      %p126 = por %p124, %p125
      %p127 = scmp.ne.s32.totalorder %s118, %s119
      %p128 = scmp.eq.s32.totalorder %s24, 0
      %p129 = por %p127, %p128
      %p130 = scmp.ne.s32.totalorder %s118, %s119
      %p131 = scmp.eq.s32.totalorder %s25, 1
      %p132 = por %p130, %p131
      %p134 = scmp.ne.s32.totalorder %s119, %s133
      %p135 = scmp.eq.s32.totalorder %s25, 0
      %p136 = por %p134, %p135
      %s138 = sadd.s32 %s137, 1
      %p141 = scmp.eq.s32.totalorder %s19, 1
      %p142 = scmp.ne.s32.totalorder %s137, %s139
      %p143 = scmp.eq.s32.totalorder %s19, 0
      %p144 = por %p142, %p143
      %p145 = scmp.ne.s32.totalorder %s137, %s139
      %p146 = scmp.eq.s32.totalorder %s24, 1
      %p147 = por %p145, %p146
      %p148 = scmp.ne.s32.totalorder %s139, %s140
      %p149 = scmp.eq.s32.totalorder %s24, 0
      %p150 = por %p148, %p149
      %p151 = scmp.ne.s32.totalorder %s139, %s140
      %p152 = scmp.eq.s32.totalorder %s25, 1
      %p153 = por %p151, %p152
      %p155 = scmp.ne.s32.totalorder %s140, %s154
      %p156 = scmp.eq.s32.totalorder %s25, 0
      %p157 = por %p155, %p156
      %s158 = ssub.s32 %s19, %s26
      %p159 = scmp.eq.s32.totalorder %s158, 0
      %s161 = sadd.s32 %s160, 1
      %s162 = scalar_select %p159, %s160, %s161
      %p165 = pneg %p159
      %p166 = scmp.eq.s32.totalorder %s19, 1
      %p167 = por %p165, %p166
      %p168 = scmp.ne.s32.totalorder %s160, %s163
      %p169 = scmp.eq.s32.totalorder %s19, 0
      %p170 = por %p168, %p169
      %p171 = scmp.ne.s32.totalorder %s160, %s163
      %p172 = scmp.eq.s32.totalorder %s24, 1
      %p173 = por %p171, %p172
      %p174 = scmp.ne.s32.totalorder %s163, %s164
      %p175 = scmp.eq.s32.totalorder %s24, 0
      %p176 = por %p174, %p175
      %p177 = scmp.ne.s32.totalorder %s163, %s164
      %p178 = scmp.eq.s32.totalorder %s25, 1
      %p179 = por %p177, %p178
      %p181 = scmp.ne.s32.totalorder %s164, %s180
      %p182 = scmp.eq.s32.totalorder %s25, 0
      %p183 = por %p181, %p182
      %p184 = scmp.le.s32.totalorder 1, %s19
      %p185 = scmp.lt.s32.totalorder %s19, 3
      %p186 = pnand %p184, %p185
      %p187 = pneg %p186
      // Predicated region
      $region9: #{tpu_custom_call.1} parent=5 // pred_check
        _
      $region10: #{tpu_custom_call.1} parent=5 // pred_check_branch
        %189 = sbr.rel (%p186) target = $region12
      $region11: #{tpu_custom_call.1} parent=5 // pred_region
        %s190 = ssub.s32 %s19, 1
        // Predicated region
        $region13: #{tpu_custom_call.1} parent=11 // pred_check
          %p191 = pneg %p66
        $region14: #{tpu_custom_call.1} parent=11 // pred_check_branch
          %193 = sbr.rel (%p191) target = $region16
        $region15: #{tpu_custom_call.1} parent=11 // pred_region
          %s195 = ssub.s32 1024, 1024
          %196 = vsyncadd [#allocation6], %s195
          %s197 = sshll.u32 [#allocation5], 4
          %s198 = int_to_ptr.vmem [resolvable:$true] %s197
          %203 = dma.hbm_to_vmem [thread:$0]  %s1, 1024, %s198, [#allocation6], 64, 64, 4
        $region16: #{tpu_custom_call.1} parent=11 // pred_fallthru
          _
        // Predicated region
        $region17: #{tpu_custom_call.1} parent=11 // pred_check
          %p204 = pneg %p87
        $region18: #{tpu_custom_call.1} parent=11 // pred_check_branch
          %206 = sbr.rel (%p204) target = $region20
        $region19: #{tpu_custom_call.1} parent=11 // pred_region
          _
        $region20: #{tpu_custom_call.1} parent=11 // pred_fallthru
          _
        // Predicated region
        $region21: #{tpu_custom_call.1} parent=11 // pred_check
          %p207 = pneg %p108
        $region22: #{tpu_custom_call.1} parent=11 // pred_check_branch
          %209 = sbr.rel (%p207) target = $region24
        $region23: #{tpu_custom_call.1} parent=11 // pred_region
          _
        $region24: #{tpu_custom_call.1} parent=11 // pred_fallthru
          _
        // Predicated region
        $region25: #{tpu_custom_call.1} parent=11 // pred_check
          %p210 = pneg %p129
        $region26: #{tpu_custom_call.1} parent=11 // pred_check_branch
          %212 = sbr.rel (%p210) target = $region28
        $region27: #{tpu_custom_call.1} parent=11 // pred_region
          %s214 = ssub.s32 2048, 2048
          %215 = vsyncadd [#allocation6], %s214
          %s216 = sshll.u32 [#allocation7], 4
          %s217 = int_to_ptr.vmem [resolvable:$true] %s216
          %222 = dma.hbm_to_vmem [thread:$0]  %s4, 2048, %s217, [#allocation6], 128, 128, 8
        $region28: #{tpu_custom_call.1} parent=11 // pred_fallthru
          _
        // Predicated region
        $region29: #{tpu_custom_call.1} parent=11 // pred_check
          %p223 = pneg %p150
        $region30: #{tpu_custom_call.1} parent=11 // pred_check_branch
          %225 = sbr.rel (%p223) target = $region32
        $region31: #{tpu_custom_call.1} parent=11 // pred_region
          _
        $region32: #{tpu_custom_call.1} parent=11 // pred_fallthru
          _
      $region12: #{tpu_custom_call.1} parent=5 // pred_fallthru
        _
      %p226 = scmp.lt.s32.totalorder %s19, 2
      // Predicated region
      $region33: #{tpu_custom_call.1} parent=5 // pred_check
        %p227 = pneg %p226
      $region34: #{tpu_custom_call.1} parent=5 // pred_check_branch
        %229 = sbr.rel (%p227) target = $region36
      $region35: #{tpu_custom_call.1} parent=5 // pred_region
        // Predicated region
        $region37: #{tpu_custom_call.1} parent=35 // pred_check
          %p230 = pneg %p39
        $region38: #{tpu_custom_call.1} parent=35 // pred_check_branch
          %232 = sbr.rel (%p230) target = $region40
        $region39: #{tpu_custom_call.1} parent=35 // pred_region
          %s233 = sand.u32 %s29, 1
          %s234 = scalar_lea.sflag [#allocation3], %s233
          %s235 = sand.u32 %s29, 1
          %s236 = smul.addr %s235, 128
          %s237 = scalar_lea.vmem [#allocation2], %s236
          %s238 = smul.u32 8, %s19
          %s240 = ssub.s32 2048, 2048
          %241 = vsyncadd %s234, %s240
          %s242 = smul.addr %s238, 2
          %s243 = smul.addr %s242, 128
          %s244 = scalar_lea.hbm %s0, %s243
          %s245 = sshll.u32 %s237, 4
          %s246 = int_to_ptr.vmem [resolvable:$true] %s245
          %251 = dma.hbm_to_vmem [thread:$0]  %s244, 2048, %s246, %s234, 128, 128, 8
        $region40: #{tpu_custom_call.1} parent=35 // pred_fallthru
          _
      $region36: #{tpu_custom_call.1} parent=5 // pred_fallthru
        _
      %p252 = scmp.le.s32.totalorder 1, %s19
      %p253 = scmp.lt.s32.totalorder %s19, 3
      %p254 = pnand %p252, %p253
      %p255 = pneg %p254
      // Predicated region
      $region41: #{tpu_custom_call.1} parent=5 // pred_check
        _
      $region42: #{tpu_custom_call.1} parent=5 // pred_check_branch
        %257 = sbr.rel (%p254) target = $region44
      $region43: #{tpu_custom_call.1} parent=5 // pred_region
        %s258 = ssub.s32 %s19, 1
        %s259 = sand.u32 %s32, 1
        %s260 = scalar_lea.sflag [#allocation3], %s259
        %s261 = sand.u32 %s32, 1
        %s262 = smul.addr %s261, 128
        %s263 = scalar_lea.vmem [#allocation2], %s262
        // Predicated region
        $region45: #{tpu_custom_call.1} parent=43 // pred_check
          %p264 = pneg %p45
        $region46: #{tpu_custom_call.1} parent=43 // pred_check_branch
          %266 = sbr.rel (%p264) target = $region48
        $region47: #{tpu_custom_call.1} parent=43 // pred_region
          %267 = dma.done %s260, 2048
        $region48: #{tpu_custom_call.1} parent=43 // pred_fallthru
          _
        // Predicated region
        $region49: #{tpu_custom_call.1} parent=43 // pred_check
          %p268 = pneg %p66
        $region50: #{tpu_custom_call.1} parent=43 // pred_check_branch
          %270 = sbr.rel (%p268) target = $region52
        $region51: #{tpu_custom_call.1} parent=43 // pred_region
          %271 = dma.done [#allocation6], 1024
        $region52: #{tpu_custom_call.1} parent=43 // pred_fallthru
          _
        // Predicated region
        $region53: #{tpu_custom_call.1} parent=43 // pred_check
          %p272 = pneg %p129
        $region54: #{tpu_custom_call.1} parent=43 // pred_check_branch
          %274 = sbr.rel (%p272) target = $region56
        $region55: #{tpu_custom_call.1} parent=43 // pred_region
          %275 = dma.done [#allocation6], 2048
        $region56: #{tpu_custom_call.1} parent=43 // pred_fallthru
          _
        %s276 = sand.u32 %s32, 1
        %s277 = scalar_lea.sflag [#allocation3], %s276
        %s278 = sand.u32 %s32, 1
        %s279 = smul.addr %s278, 128
        %s280 = scalar_lea.vmem [#allocation2], %s279
        %p281 = pneg %p45
        %p282 = pneg %p42
        %p283 = pneg %p66
        %p284 = pneg %p63
        %p285 = pneg %p87
        %p286 = pneg %p84
        %p287 = pneg %p108
        %p288 = pneg %p105
        %p289 = pneg %p129
        %p290 = pneg %p126
        %p291 = pneg %p150
        %p292 = pneg %p147
        %p293 = pneg %p176
        %p294 = pneg %p173
        %s295 = sand.u32 %s163, 1
        %s296 = scalar_lea.sflag [#allocation4], %s295
        %s297 = sand.u32 %s163, 1
        %s298 = smul.addr %s297, 16
        %s299 = scalar_lea.vmem [#allocation8], %s298
        %s300 = smul.u32 8, %s24
        %v302 = vld [vmem:[%s263] sm:$0xff]
        %v303 = vld [vmem:[%s263 + $0x8] sm:$0xff]
        %v304 = vld [vmem:[%s263 + $0x10] sm:$0xff]
        %v305 = vld [vmem:[%s263 + $0x18] sm:$0xff]
        %v306 = vld [vmem:[%s263 + $0x20] sm:$0xff]
        %v307 = vld [vmem:[%s263 + $0x28] sm:$0xff]
        %v308 = vld [vmem:[%s263 + $0x30] sm:$0xff]
        %v309 = vld [vmem:[%s263 + $0x38] sm:$0xff]
        %v310 = vld [vmem:[%s263 + $0x40] sm:$0xff]
        %v311 = vld [vmem:[%s263 + $0x48] sm:$0xff]
        %v312 = vld [vmem:[%s263 + $0x50] sm:$0xff]
        %v313 = vld [vmem:[%s263 + $0x58] sm:$0xff]
        %v314 = vld [vmem:[%s263 + $0x60] sm:$0xff]
        %v315 = vld [vmem:[%s263 + $0x68] sm:$0xff]
        %v316 = vld [vmem:[%s263 + $0x70] sm:$0xff]
        %v317 = vld [vmem:[%s263 + $0x78] sm:$0xff]
        %v318 = vpack.c.bf16 %v303, %v302
        %v319 = vpack.c.bf16 %v305, %v304
        %v320 = vpack.c.bf16 %v307, %v306
        %v321 = vpack.c.bf16 %v309, %v308
        %v322 = vpack.c.bf16 %v311, %v310
        %v323 = vpack.c.bf16 %v313, %v312
        %v324 = vpack.c.bf16 %v315, %v314
        %v325 = vpack.c.bf16 %v317, %v316
        %v326 = vld [vmem:[#allocation5] sm:$0xf]
        %v327 = vld [vmem:[#allocation5 + $0x4] sm:$0xf]
        %v328 = vld [vmem:[#allocation5 + $0x8] sm:$0xf]
        %v329 = vld [vmem:[#allocation5 + $0xc] sm:$0xf]
        %v330 = vld [vmem:[#allocation5 + $0x10] sm:$0xf]
        %v331 = vld [vmem:[#allocation5 + $0x14] sm:$0xf]
        %v332 = vld [vmem:[#allocation5 + $0x18] sm:$0xf]
        %v333 = vld [vmem:[#allocation5 + $0x1c] sm:$0xf]
        %v334 = vld [vmem:[#allocation5 + $0x20] sm:$0xf]
        %v335 = vld [vmem:[#allocation5 + $0x24] sm:$0xf]
        %v336 = vld [vmem:[#allocation5 + $0x28] sm:$0xf]
        %v337 = vld [vmem:[#allocation5 + $0x2c] sm:$0xf]
        %v338 = vld [vmem:[#allocation5 + $0x30] sm:$0xf]
        %v339 = vld [vmem:[#allocation5 + $0x34] sm:$0xf]
        %v340 = vld [vmem:[#allocation5 + $0x38] sm:$0xf]
        %v341 = vld [vmem:[#allocation5 + $0x3c] sm:$0xf]
        %v358 = vunpack.c.l.b16 %v326
        %v359 = vunpack.c.l.b16 %v327
        %v360 = vunpack.c.l.b16 %v328
        %v361 = vunpack.c.l.b16 %v329
        %v362 = vunpack.c.l.b16 %v330
        %v363 = vunpack.c.l.b16 %v331
        %v364 = vunpack.c.l.b16 %v332
        %v365 = vunpack.c.l.b16 %v333
        %v366 = vunpack.c.l.b16 %v334
        %v367 = vunpack.c.l.b16 %v335
        %v368 = vunpack.c.l.b16 %v336
        %v369 = vunpack.c.l.b16 %v337
        %v370 = vunpack.c.l.b16 %v338
        %v371 = vunpack.c.l.b16 %v339
        %v372 = vunpack.c.l.b16 %v340
        %v373 = vunpack.c.l.b16 %v341
        %v374 = vpack.c.b16 %v359, %v358
        %v375 = vpack.c.b16 %v361, %v360
        %v376 = vpack.c.b16 %v363, %v362
        %v377 = vpack.c.b16 %v365, %v364
        %v378 = vpack.c.b16 %v367, %v366
        %v379 = vpack.c.b16 %v369, %v368
        %v380 = vpack.c.b16 %v371, %v370
        %v381 = vpack.c.b16 %v373, %v372
        %390 = vmatprep.subr.bf16.mxu0 0
        %391 = vmatpush1.bf16.msra.mxu0 %v374
        %392 = vmatprep.subr.bf16.mxu0 0
        %393 = vmatpush1.bf16.msra.mxu0 %v375
        %394 = vmatprep.subr.bf16.mxu0 0
        %395 = vmatpush1.bf16.msra.mxu0 %v376
        %396 = vmatprep.subr.bf16.mxu0 0
        %397 = vmatpush1.bf16.msra.mxu0 %v377
        %398 = vmatprep.subr.bf16.mxu0 0
        %399 = vmatpush1.bf16.msra.mxu0 %v378
        %400 = vmatprep.subr.bf16.mxu0 0
        %401 = vmatpush1.bf16.msra.mxu0 %v379
        %402 = vmatprep.subr.bf16.mxu0 0
        %403 = vmatpush1.bf16.msra.mxu0 %v380
        %404 = vmatprep.subr.bf16.mxu0 0
        %405 = vmatpush1.bf16.msra.mxu0 %v381
        %406 = vmatprep.subr.bf16.mxu0 0
        %407 = vmatpush1.bf16.msra.mxu0 0
        %408 = vmatprep.subr.bf16.mxu0 0
        %409 = vmatpush1.bf16.msra.mxu0 0
        %410 = vmatprep.subr.bf16.mxu0 0
        %411 = vmatpush1.bf16.msra.mxu0 0
        %412 = vmatprep.subr.bf16.mxu0 0
        %413 = vmatpush1.bf16.msra.mxu0 0
        %414 = vmatprep.subr.bf16.mxu0 0
        %415 = vmatpush1.bf16.msra.mxu0 0
        %416 = vmatprep.subr.bf16.mxu0 0
        %417 = vmatpush1.bf16.msra.mxu0 0
        %418 = vmatprep.subr.bf16.mxu0 0
        %419 = vmatpush1.bf16.msra.mxu0 0
        %420 = vmatprep.subr.bf16.mxu0 0
        %421 = vmatpush1.bf16.msra.mxu0 0
        %422 = vmatprep.mubr.bf16.mxu0 0
        %423 = vmatmul.mubr.bf16.gmra.mrb[0].mxu0 %v318
        %v424 = vpop.f32.mrb[0].mxu0
        %v425 = vadd.f32 0.0, %v424
        %v426 = vpop.f32.mrb[0].mxu0
        %v427 = vpop.f32.mrb[0].mxu0
        %v428 = vadd.f32 0.0, %v427
        %v429 = vpop.f32.mrb[0].mxu0
        %430 = vmatprep.mubr.bf16.mxu0 0
        %431 = vmatmul.mubr.bf16.gmra.mrb[0].mxu0 %v319
        %v432 = vpop.f32.mrb[0].mxu0
        %v433 = vadd.f32 0.0, %v432
        %v434 = vpop.f32.mrb[0].mxu0
        %v435 = vpop.f32.mrb[0].mxu0
        %v436 = vadd.f32 0.0, %v435
        %v437 = vpop.f32.mrb[0].mxu0
        %438 = vmatprep.mubr.bf16.mxu0 0
        %439 = vmatmul.mubr.bf16.gmra.mrb[0].mxu0 %v320
        %v440 = vpop.f32.mrb[0].mxu0
        %v441 = vadd.f32 0.0, %v440
        %v442 = vpop.f32.mrb[0].mxu0
        %v443 = vpop.f32.mrb[0].mxu0
        %v444 = vadd.f32 0.0, %v443
        %v445 = vpop.f32.mrb[0].mxu0
        %446 = vmatprep.mubr.bf16.mxu0 0
        %447 = vmatmul.mubr.bf16.gmra.mrb[0].mxu0 %v321
        %v448 = vpop.f32.mrb[0].mxu0
        %v449 = vadd.f32 0.0, %v448
        %v450 = vpop.f32.mrb[0].mxu0
        %v451 = vpop.f32.mrb[0].mxu0
        %v452 = vadd.f32 0.0, %v451
        %v453 = vpop.f32.mrb[0].mxu0
        %454 = vmatprep.mubr.bf16.mxu0 0
        %455 = vmatmul.mubr.bf16.gmra.mrb[0].mxu0 %v322
        %v456 = vpop.f32.mrb[0].mxu0
        %v457 = vadd.f32 0.0, %v456
        %v458 = vpop.f32.mrb[0].mxu0
        %v459 = vpop.f32.mrb[0].mxu0
        %v460 = vadd.f32 0.0, %v459
        %v461 = vpop.f32.mrb[0].mxu0
        %462 = vmatprep.mubr.bf16.mxu0 0
        %463 = vmatmul.mubr.bf16.gmra.mrb[0].mxu0 %v323
        %v464 = vpop.f32.mrb[0].mxu0
        %v465 = vadd.f32 0.0, %v464
        %v466 = vpop.f32.mrb[0].mxu0
        %v467 = vpop.f32.mrb[0].mxu0
        %v468 = vadd.f32 0.0, %v467
        %v469 = vpop.f32.mrb[0].mxu0
        %470 = vmatprep.mubr.bf16.mxu0 0
        %471 = vmatmul.mubr.bf16.gmra.mrb[0].mxu0 %v324
        %v472 = vpop.f32.mrb[0].mxu0
        %v473 = vadd.f32 0.0, %v472
        %v474 = vpop.f32.mrb[0].mxu0
        %v475 = vpop.f32.mrb[0].mxu0
        %v476 = vadd.f32 0.0, %v475
        %v477 = vpop.f32.mrb[0].mxu0
        %478 = vmatprep.mubr.bf16.mxu0 0
        %479 = vmatmul.mubr.bf16.gmra.mrb[0].mxu0 %v325
        %v480 = vpop.f32.mrb[0].mxu0
        %v481 = vadd.f32 0.0, %v480
        %v482 = vpop.f32.mrb[0].mxu0
        %v483 = vpop.f32.mrb[0].mxu0
        %v484 = vadd.f32 0.0, %v483
        %v485 = vpop.f32.mrb[0].mxu0
        %486 = vdwg.mxu0
        %v487 = vld [vmem:[%s2] sm:$0x1]
        %v489 = vlaneseq
        %v490 = vshrl.u32 %v489, 7
        %v491 = vsub.s32 0, %v490
        %v492 = vrot.slane %v487, %v491
        %v494 = vadd.f32 %v425, %v492
        %v495 = vadd.f32 %v428, %v492
        %v496 = vadd.f32 %v433, %v492
        %v497 = vadd.f32 %v436, %v492
        %v498 = vadd.f32 %v441, %v492
        %v499 = vadd.f32 %v444, %v492
        %v500 = vadd.f32 %v449, %v492
        %v501 = vadd.f32 %v452, %v492
        %v502 = vadd.f32 %v457, %v492
        %v503 = vadd.f32 %v460, %v492
        %v504 = vadd.f32 %v465, %v492
        %v505 = vadd.f32 %v468, %v492
        %v506 = vadd.f32 %v473, %v492
        %v507 = vadd.f32 %v476, %v492
        %v508 = vadd.f32 %v481, %v492
        %v509 = vadd.f32 %v484, %v492
        %v510 = vmax.f32 %v494, 0.0
        %v511 = vmax.f32 %v495, 0.0
        %v512 = vmax.f32 %v496, 0.0
        %v513 = vmax.f32 %v497, 0.0
        %v514 = vmax.f32 %v498, 0.0
        %v515 = vmax.f32 %v499, 0.0
        %v516 = vmax.f32 %v500, 0.0
        %v517 = vmax.f32 %v501, 0.0
        %v518 = vmax.f32 %v502, 0.0
        %v519 = vmax.f32 %v503, 0.0
        %v520 = vmax.f32 %v504, 0.0
        %v521 = vmax.f32 %v505, 0.0
        %v522 = vmax.f32 %v506, 0.0
        %v523 = vmax.f32 %v507, 0.0
        %v524 = vmax.f32 %v508, 0.0
        %v525 = vmax.f32 %v509, 0.0
        %v526 = vld [vmem:[%s3] sm:$0x1]
        %v528 = vlaneseq
        %v529 = vshrl.u32 %v528, 7
        %v530 = vsub.s32 0, %v529
        %v531 = vrot.slane %v526, %v530
        %v533 = vmul.f32 %v510, %v531
        %v534 = vmul.f32 %v511, %v531
        %v535 = vmul.f32 %v512, %v531
        %v536 = vmul.f32 %v513, %v531
        %v537 = vmul.f32 %v514, %v531
        %v538 = vmul.f32 %v515, %v531
        %v539 = vmul.f32 %v516, %v531
        %v540 = vmul.f32 %v517, %v531
        %v541 = vmul.f32 %v518, %v531
        %v542 = vmul.f32 %v519, %v531
        %v543 = vmul.f32 %v520, %v531
        %v544 = vmul.f32 %v521, %v531
        %v545 = vmul.f32 %v522, %v531
        %v546 = vmul.f32 %v523, %v531
        %v547 = vmul.f32 %v524, %v531
        %v548 = vmul.f32 %v525, %v531
        %549 = vadd.xlane.f32.xlu0 %v533
        %v550 = vpop.xlane.xlu0 %549
        %551 = vadd.xlane.f32.xlu0 %v534
        %v552 = vpop.xlane.xlu0 %551
        %553 = vadd.xlane.f32.xlu0 %v535
        %v554 = vpop.xlane.xlu0 %553
        %555 = vadd.xlane.f32.xlu0 %v536
        %v556 = vpop.xlane.xlu0 %555
        %557 = vadd.xlane.f32.xlu0 %v537
        %v558 = vpop.xlane.xlu0 %557
        %559 = vadd.xlane.f32.xlu0 %v538
        %v560 = vpop.xlane.xlu0 %559
        %561 = vadd.xlane.f32.xlu0 %v539
        %v562 = vpop.xlane.xlu0 %561
        %563 = vadd.xlane.f32.xlu0 %v540
        %v564 = vpop.xlane.xlu0 %563
        %565 = vadd.xlane.f32.xlu0 %v541
        %v566 = vpop.xlane.xlu0 %565
        %567 = vadd.xlane.f32.xlu0 %v542
        %v568 = vpop.xlane.xlu0 %567
        %569 = vadd.xlane.f32.xlu0 %v543
        %v570 = vpop.xlane.xlu0 %569
        %571 = vadd.xlane.f32.xlu0 %v544
        %v572 = vpop.xlane.xlu0 %571
        %573 = vadd.xlane.f32.xlu0 %v545
        %v574 = vpop.xlane.xlu0 %573
        %575 = vadd.xlane.f32.xlu0 %v546
        %v576 = vpop.xlane.xlu0 %575
        %577 = vadd.xlane.f32.xlu0 %v547
        %v578 = vpop.xlane.xlu0 %577
        %579 = vadd.xlane.f32.xlu0 %v548
        %v580 = vpop.xlane.xlu0 %579
        %v581 = vmax.f32 %v550, %v552
        %v582 = vrot.slane %v581, 4
        %v583 = vmax.f32 %v581, %v582
        %v584 = vrot.slane %v583, 2
        %v585 = vmax.f32 %v583, %v584
        %v586 = vrot.slane %v585, 1
        %v587 = vmax.f32 %v585, %v586
        %v588 = vmax.f32 %v554, %v556
        %v589 = vrot.slane %v588, 4
        %v590 = vmax.f32 %v588, %v589
        %v591 = vrot.slane %v590, 2
        %v592 = vmax.f32 %v590, %v591
        %v593 = vrot.slane %v592, 1
        %v594 = vmax.f32 %v592, %v593
        %v595 = vmax.f32 %v558, %v560
        %v596 = vrot.slane %v595, 4
        %v597 = vmax.f32 %v595, %v596
        %v598 = vrot.slane %v597, 2
        %v599 = vmax.f32 %v597, %v598
        %v600 = vrot.slane %v599, 1
        %v601 = vmax.f32 %v599, %v600
        %v602 = vmax.f32 %v562, %v564
        %v603 = vrot.slane %v602, 4
        %v604 = vmax.f32 %v602, %v603
        %v605 = vrot.slane %v604, 2
        %v606 = vmax.f32 %v604, %v605
        %v607 = vrot.slane %v606, 1
        %v608 = vmax.f32 %v606, %v607
        %v609 = vmax.f32 %v566, %v568
        %v610 = vrot.slane %v609, 4
        %v611 = vmax.f32 %v609, %v610
        %v612 = vrot.slane %v611, 2
        %v613 = vmax.f32 %v611, %v612
        %v614 = vrot.slane %v613, 1
        %v615 = vmax.f32 %v613, %v614
        %v616 = vmax.f32 %v570, %v572
        %v617 = vrot.slane %v616, 4
        %v618 = vmax.f32 %v616, %v617
        %v619 = vrot.slane %v618, 2
        %v620 = vmax.f32 %v618, %v619
        %v621 = vrot.slane %v620, 1
        %v622 = vmax.f32 %v620, %v621
        %v623 = vmax.f32 %v574, %v576
        %v624 = vrot.slane %v623, 4
        %v625 = vmax.f32 %v623, %v624
        %v626 = vrot.slane %v625, 2
        %v627 = vmax.f32 %v625, %v626
        %v628 = vrot.slane %v627, 1
        %v629 = vmax.f32 %v627, %v628
        %v630 = vmax.f32 %v578, %v580
        %v631 = vrot.slane %v630, 4
        %v632 = vmax.f32 %v630, %v631
        %v633 = vrot.slane %v632, 2
        %v634 = vmax.f32 %v632, %v633
        %v635 = vrot.slane %v634, 1
        %v636 = vmax.f32 %v634, %v635
        %v637 = vsub.f32 %v550, %v587
        %v638 = vsub.f32 %v552, %v587
        %v639 = vsub.f32 %v554, %v594
        %v640 = vsub.f32 %v556, %v594
        %v641 = vsub.f32 %v558, %v601
        %v642 = vsub.f32 %v560, %v601
        %v643 = vsub.f32 %v562, %v608
        %v644 = vsub.f32 %v564, %v608
        %v645 = vsub.f32 %v566, %v615
        %v646 = vsub.f32 %v568, %v615
        %v647 = vsub.f32 %v570, %v622
        %v648 = vsub.f32 %v572, %v622
        %v649 = vsub.f32 %v574, %v629
        %v650 = vsub.f32 %v576, %v629
        %v651 = vsub.f32 %v578, %v636
        %v652 = vsub.f32 %v580, %v636
        %v653 = vmul.f32 %v637, 1.442695
        %v654 = vpow.pop %v653
        %v655 = vmul.f32 %v638, 1.442695
        %v656 = vpow.pop %v655
        %v657 = vmul.f32 %v639, 1.442695
        %v658 = vpow.pop %v657
        %v659 = vmul.f32 %v640, 1.442695
        %v660 = vpow.pop %v659
        %v661 = vmul.f32 %v641, 1.442695
        %v662 = vpow.pop %v661
        %v663 = vmul.f32 %v642, 1.442695
        %v664 = vpow.pop %v663
        %v665 = vmul.f32 %v643, 1.442695
        %v666 = vpow.pop %v665
        %v667 = vmul.f32 %v644, 1.442695
        %v668 = vpow.pop %v667
        %v669 = vmul.f32 %v645, 1.442695
        %v670 = vpow.pop %v669
        %v671 = vmul.f32 %v646, 1.442695
        %v672 = vpow.pop %v671
        %v673 = vmul.f32 %v647, 1.442695
        %v674 = vpow.pop %v673
        %v675 = vmul.f32 %v648, 1.442695
        %v676 = vpow.pop %v675
        %v677 = vmul.f32 %v649, 1.442695
        %v678 = vpow.pop %v677
        %v679 = vmul.f32 %v650, 1.442695
        %v680 = vpow.pop %v679
        %v681 = vmul.f32 %v651, 1.442695
        %v682 = vpow.pop %v681
        %v683 = vmul.f32 %v652, 1.442695
        %v684 = vpow.pop %v683
        %v685 = vadd.f32 %v654, %v656
        %v686 = vrot.slane %v685, 4
        %v687 = vadd.f32 %v685, %v686
        %v688 = vrot.slane %v687, 2
        %v689 = vadd.f32 %v687, %v688
        %v690 = vrot.slane %v689, 1
        %v691 = vadd.f32 %v689, %v690
        %v692 = vadd.f32 %v658, %v660
        %v693 = vrot.slane %v692, 4
        %v694 = vadd.f32 %v692, %v693
        %v695 = vrot.slane %v694, 2
        %v696 = vadd.f32 %v694, %v695
        %v697 = vrot.slane %v696, 1
        %v698 = vadd.f32 %v696, %v697
        %v699 = vadd.f32 %v662, %v664
        %v700 = vrot.slane %v699, 4
        %v701 = vadd.f32 %v699, %v700
        %v702 = vrot.slane %v701, 2
        %v703 = vadd.f32 %v701, %v702
        %v704 = vrot.slane %v703, 1
        %v705 = vadd.f32 %v703, %v704
        %v706 = vadd.f32 %v666, %v668
        %v707 = vrot.slane %v706, 4
        %v708 = vadd.f32 %v706, %v707
        %v709 = vrot.slane %v708, 2
        %v710 = vadd.f32 %v708, %v709
        %v711 = vrot.slane %v710, 1
        %v712 = vadd.f32 %v710, %v711
        %v713 = vadd.f32 %v670, %v672
        %v714 = vrot.slane %v713, 4
        %v715 = vadd.f32 %v713, %v714
        %v716 = vrot.slane %v715, 2
        %v717 = vadd.f32 %v715, %v716
        %v718 = vrot.slane %v717, 1
        %v719 = vadd.f32 %v717, %v718
        %v720 = vadd.f32 %v674, %v676
        %v721 = vrot.slane %v720, 4
        %v722 = vadd.f32 %v720, %v721
        %v723 = vrot.slane %v722, 2
        %v724 = vadd.f32 %v722, %v723
        %v725 = vrot.slane %v724, 1
        %v726 = vadd.f32 %v724, %v725
        %v727 = vadd.f32 %v678, %v680
        %v728 = vrot.slane %v727, 4
        %v729 = vadd.f32 %v727, %v728
        %v730 = vrot.slane %v729, 2
        %v731 = vadd.f32 %v729, %v730
        %v732 = vrot.slane %v731, 1
        %v733 = vadd.f32 %v731, %v732
        %v734 = vadd.f32 %v682, %v684
        %v735 = vrot.slane %v734, 4
        %v736 = vadd.f32 %v734, %v735
        %v737 = vrot.slane %v736, 2
        %v738 = vadd.f32 %v736, %v737
        %v739 = vrot.slane %v738, 1
        %v740 = vadd.f32 %v738, %v739
        %v741 = vrcp.pop %v691
        %v742 = vmul.f32 %v654, %v741
        %v743 = vmul.f32 %v656, %v741
        %v744 = vrcp.pop %v698
        %v745 = vmul.f32 %v658, %v744
        %v746 = vmul.f32 %v660, %v744
        %v747 = vrcp.pop %v705
        %v748 = vmul.f32 %v662, %v747
        %v749 = vmul.f32 %v664, %v747
        %v750 = vrcp.pop %v712
        %v751 = vmul.f32 %v666, %v750
        %v752 = vmul.f32 %v668, %v750
        %v753 = vrcp.pop %v719
        %v754 = vmul.f32 %v670, %v753
        %v755 = vmul.f32 %v672, %v753
        %v756 = vrcp.pop %v726
        %v757 = vmul.f32 %v674, %v756
        %v758 = vmul.f32 %v676, %v756
        %v759 = vrcp.pop %v733
        %v760 = vmul.f32 %v678, %v759
        %v761 = vmul.f32 %v680, %v759
        %v762 = vrcp.pop %v740
        %v763 = vmul.f32 %v682, %v762
        %v764 = vmul.f32 %v684, %v762
        %v765 = vmul.f32 %v742, %v302
        %v766 = vmul.f32 %v743, %v303
        %v767 = vmul.f32 %v745, %v304
        %v768 = vmul.f32 %v746, %v305
        %v769 = vmul.f32 %v748, %v306
        %v770 = vmul.f32 %v749, %v307
        %v771 = vmul.f32 %v751, %v308
        %v772 = vmul.f32 %v752, %v309
        %v773 = vmul.f32 %v754, %v310
        %v774 = vmul.f32 %v755, %v311
        %v775 = vmul.f32 %v757, %v312
        %v776 = vmul.f32 %v758, %v313
        %v777 = vmul.f32 %v760, %v314
        %v778 = vmul.f32 %v761, %v315
        %v779 = vmul.f32 %v763, %v316
        %v780 = vmul.f32 %v764, %v317
        %v781 = vadd.f32 %v765, %v766
        %v782 = vrot.slane %v781, 4
        %v783 = vadd.f32 %v781, %v782
        %v784 = vrot.slane %v783, 2
        %v785 = vadd.f32 %v783, %v784
        %v786 = vrot.slane %v785, 1
        %v787 = vadd.f32 %v785, %v786
        %v788 = vadd.f32 %v767, %v768
        %v789 = vrot.slane %v788, 4
        %v790 = vadd.f32 %v788, %v789
        %v791 = vrot.slane %v790, 2
        %v792 = vadd.f32 %v790, %v791
        %v793 = vrot.slane %v792, 1
        %v794 = vadd.f32 %v792, %v793
        %v795 = vadd.f32 %v769, %v770
        %v796 = vrot.slane %v795, 4
        %v797 = vadd.f32 %v795, %v796
        %v798 = vrot.slane %v797, 2
        %v799 = vadd.f32 %v797, %v798
        %v800 = vrot.slane %v799, 1
        %v801 = vadd.f32 %v799, %v800
        %v802 = vadd.f32 %v771, %v772
        %v803 = vrot.slane %v802, 4
        %v804 = vadd.f32 %v802, %v803
        %v805 = vrot.slane %v804, 2
        %v806 = vadd.f32 %v804, %v805
        %v807 = vrot.slane %v806, 1
        %v808 = vadd.f32 %v806, %v807
        %v809 = vadd.f32 %v773, %v774
        %v810 = vrot.slane %v809, 4
        %v811 = vadd.f32 %v809, %v810
        %v812 = vrot.slane %v811, 2
        %v813 = vadd.f32 %v811, %v812
        %v814 = vrot.slane %v813, 1
        %v815 = vadd.f32 %v813, %v814
        %v816 = vadd.f32 %v775, %v776
        %v817 = vrot.slane %v816, 4
        %v818 = vadd.f32 %v816, %v817
        %v819 = vrot.slane %v818, 2
        %v820 = vadd.f32 %v818, %v819
        %v821 = vrot.slane %v820, 1
        %v822 = vadd.f32 %v820, %v821
        %v823 = vadd.f32 %v777, %v778
        %v824 = vrot.slane %v823, 4
        %v825 = vadd.f32 %v823, %v824
        %v826 = vrot.slane %v825, 2
        %v827 = vadd.f32 %v825, %v826
        %v828 = vrot.slane %v827, 1
        %v829 = vadd.f32 %v827, %v828
        %v830 = vadd.f32 %v779, %v780
        %v831 = vrot.slane %v830, 4
        %v832 = vadd.f32 %v830, %v831
        %v833 = vrot.slane %v832, 2
        %v834 = vadd.f32 %v832, %v833
        %v835 = vrot.slane %v834, 1
        %v836 = vadd.f32 %v834, %v835
        %v837 = vpack.c.bf16 %v787, %v787
        %v838 = vpack.c.bf16 %v794, %v794
        %v839 = vpack.c.bf16 %v801, %v801
        %v840 = vpack.c.bf16 %v808, %v808
        %v841 = vpack.c.bf16 %v815, %v815
        %v842 = vpack.c.bf16 %v822, %v822
        %v843 = vpack.c.bf16 %v829, %v829
        %v844 = vpack.c.bf16 %v836, %v836
        %v845 = vld [vmem:[#allocation7] sm:$0xff]
        %v846 = vld [vmem:[#allocation7 + $0x8] sm:$0xff]
        %v847 = vld [vmem:[#allocation7 + $0x10] sm:$0xff]
        %v848 = vld [vmem:[#allocation7 + $0x18] sm:$0xff]
        %v849 = vld [vmem:[#allocation7 + $0x20] sm:$0xff]
        %v850 = vld [vmem:[#allocation7 + $0x28] sm:$0xff]
        %v851 = vld [vmem:[#allocation7 + $0x30] sm:$0xff]
        %v852 = vld [vmem:[#allocation7 + $0x38] sm:$0xff]
        %v853 = vld [vmem:[#allocation7 + $0x40] sm:$0xff]
        %v854 = vld [vmem:[#allocation7 + $0x48] sm:$0xff]
        %v855 = vld [vmem:[#allocation7 + $0x50] sm:$0xff]
        %v856 = vld [vmem:[#allocation7 + $0x58] sm:$0xff]
        %v857 = vld [vmem:[#allocation7 + $0x60] sm:$0xff]
        %v858 = vld [vmem:[#allocation7 + $0x68] sm:$0xff]
        %v859 = vld [vmem:[#allocation7 + $0x70] sm:$0xff]
        %v860 = vld [vmem:[#allocation7 + $0x78] sm:$0xff]
        %v861 = vld [vmem:[%s5] sm:$0x3]
        %v863 = vlaneseq
        %v864 = vshrl.u32 %v863, 7
        %v865 = vsub.s32 0, %v864
        %v866 = vrot.slane %v861, %v865
        %v867 = vlaneseq
        %v868 = vshrl.u32 %v867, 7
        %v869 = vsub.s32 1, %v868
        %v870 = vrot.slane %v861, %v869
        %v881 = vunpack.c.l.b16 %v837
        %v882 = vunpack.c.l.b16 %v838
        %v883 = vunpack.c.l.b16 %v839
        %v884 = vunpack.c.l.b16 %v840
        %v885 = vunpack.c.l.b16 %v841
        %v886 = vunpack.c.l.b16 %v842
        %v887 = vunpack.c.l.b16 %v843
        %v888 = vunpack.c.l.b16 %v844
        %vm889 = vcmask 1041409
        %v890 = vsel %vm889, %v882, %v881
        %vm891 = vcmask 1042434
        %v892 = vsel %vm891, %v883, %v890
        %vm893 = vcmask 1043459
        %v894 = vsel %vm893, %v884, %v892
        %vm895 = vcmask 1044484
        %v896 = vsel %vm895, %v885, %v894
        %vm897 = vcmask 1045509
        %v898 = vsel %vm897, %v886, %v896
        %vm899 = vcmask 1046534
        %v900 = vsel %vm899, %v887, %v898
        %vm901 = vcmask 1047559
        %v902 = vsel %vm901, %v888, %v900
        %v903 = vpack.c.b16 %v902, %v902
        %v921 = vunpack.c.l.b16 %v845
        %v922 = vunpack.c.h.b16 %v845
        %v923 = vunpack.c.l.b16 %v846
        %v924 = vunpack.c.h.b16 %v846
        %v925 = vunpack.c.l.b16 %v847
        %v926 = vunpack.c.h.b16 %v847
        %v927 = vunpack.c.l.b16 %v848
        %v928 = vunpack.c.h.b16 %v848
        %v929 = vunpack.c.l.b16 %v849
        %v930 = vunpack.c.h.b16 %v849
        %v931 = vunpack.c.l.b16 %v850
        %v932 = vunpack.c.h.b16 %v850
        %v933 = vunpack.c.l.b16 %v851
        %v934 = vunpack.c.h.b16 %v851
        %v935 = vunpack.c.l.b16 %v852
        %v936 = vunpack.c.h.b16 %v852
        %v937 = vunpack.c.l.b16 %v853
        %v938 = vunpack.c.h.b16 %v853
        %v939 = vunpack.c.l.b16 %v854
        %v940 = vunpack.c.h.b16 %v854
        %v941 = vunpack.c.l.b16 %v855
        %v942 = vunpack.c.h.b16 %v855
        %v943 = vunpack.c.l.b16 %v856
        %v944 = vunpack.c.h.b16 %v856
        %v945 = vunpack.c.l.b16 %v857
        %v946 = vunpack.c.h.b16 %v857
        %v947 = vunpack.c.l.b16 %v858
        %v948 = vunpack.c.h.b16 %v858
        %v949 = vunpack.c.l.b16 %v859
        %v950 = vunpack.c.h.b16 %v859
        %v951 = vunpack.c.l.b16 %v860
        %v952 = vunpack.c.h.b16 %v860
        %v953 = vpack.c.b16 %v923, %v921
        %v954 = vpack.c.b16 %v924, %v922
        %v955 = vpack.c.b16 %v927, %v925
        %v956 = vpack.c.b16 %v928, %v926
        %v957 = vpack.c.b16 %v931, %v929
        %v958 = vpack.c.b16 %v932, %v930
        %v959 = vpack.c.b16 %v935, %v933
        %v960 = vpack.c.b16 %v936, %v934
        %v961 = vpack.c.b16 %v939, %v937
        %v962 = vpack.c.b16 %v940, %v938
        %v963 = vpack.c.b16 %v943, %v941
        %v964 = vpack.c.b16 %v944, %v942
        %v965 = vpack.c.b16 %v947, %v945
        %v966 = vpack.c.b16 %v948, %v946
        %v967 = vpack.c.b16 %v951, %v949
        %v968 = vpack.c.b16 %v952, %v950
        %985 = vmatprep.subr.bf16.mxu0 %v954
        %986 = vmatpush1.bf16.msra.mxu0 %v953
        %987 = vmatprep.subr.bf16.mxu0 %v956
        %988 = vmatpush1.bf16.msra.mxu0 %v955
        %989 = vmatprep.subr.bf16.mxu0 %v958
        %990 = vmatpush1.bf16.msra.mxu0 %v957
        %991 = vmatprep.subr.bf16.mxu0 %v960
        %992 = vmatpush1.bf16.msra.mxu0 %v959
        %993 = vmatprep.subr.bf16.mxu0 %v962
        %994 = vmatpush1.bf16.msra.mxu0 %v961
        %995 = vmatprep.subr.bf16.mxu0 %v964
        %996 = vmatpush1.bf16.msra.mxu0 %v963
        %997 = vmatprep.subr.bf16.mxu0 %v966
        %998 = vmatpush1.bf16.msra.mxu0 %v965
        %999 = vmatprep.subr.bf16.mxu0 %v968
        %1000 = vmatpush1.bf16.msra.mxu0 %v967
        %1001 = vmatprep.subr.bf16.mxu0 0
        %1002 = vmatpush1.bf16.msra.mxu0 0
        %1003 = vmatprep.subr.bf16.mxu0 0
        %1004 = vmatpush1.bf16.msra.mxu0 0
        %1005 = vmatprep.subr.bf16.mxu0 0
        %1006 = vmatpush1.bf16.msra.mxu0 0
        %1007 = vmatprep.subr.bf16.mxu0 0
        %1008 = vmatpush1.bf16.msra.mxu0 0
        %1009 = vmatprep.subr.bf16.mxu0 0
        %1010 = vmatpush1.bf16.msra.mxu0 0
        %1011 = vmatprep.subr.bf16.mxu0 0
        %1012 = vmatpush1.bf16.msra.mxu0 0
        %1013 = vmatprep.subr.bf16.mxu0 0
        %1014 = vmatpush1.bf16.msra.mxu0 0
        %1015 = vmatprep.subr.bf16.mxu0 0
        %1016 = vmatpush1.bf16.msra.mxu0 0
        %1017 = vmatprep.mubr.bf16.mxu0 0
        %1018 = vmatmul.mubr.bf16.gmra.mrb[0].mxu0 %v903
        %v1019 = vpop.f32.mrb[0].mxu0
        %v1020 = vadd.f32 %v866, %v1019
        %v1021 = vpop.f32.mrb[0].mxu0
        %v1022 = vadd.f32 %v870, %v1021
        %v1023 = vpop.f32.mrb[0].mxu0
        %v1024 = vpop.f32.mrb[0].mxu0
        %1025 = vdwg.mxu0
        %1026 = vst [vmem:[%s299] sm:$0xff] %v1020
        %1027 = vst [vmem:[%s299 + $0x8] sm:$0xff] %v1022
        %s1028 = sand.u32 %s163, 1
        %s1029 = scalar_lea.sflag [#allocation4], %s1028
        %s1030 = sand.u32 %s163, 1
        %s1031 = smul.addr %s1030, 16
        %s1032 = scalar_lea.vmem [#allocation8], %s1031
        // Predicated region
        $region57: #{tpu_custom_call.1} parent=43 // pred_check
          %p1033 = pneg %p173
        $region58: #{tpu_custom_call.1} parent=43 // pred_check_branch
          %1035 = sbr.rel (%p1033) target = $region60
        $region59: #{tpu_custom_call.1} parent=43 // pred_region
          %s1037 = ssub.s32 256, 256
          %1038 = vsyncadd %s1029, %s1037
          %s1039 = smul.addr %s24, 2
          %s1040 = smul.addr %s1039, 128
          %s1041 = scalar_lea.hbm %s6, %s1040
          %s1043 = sshll.u32 %s1032, 4
          %s1044 = int_to_ptr.vmem [resolvable:$true] %s1043
          %1046 = dma.vmem_to_hbm [thread:$0]  %s1044, 256, %s1041, %s1029
        $region60: #{tpu_custom_call.1} parent=43 // pred_fallthru
          _
      $region44: #{tpu_custom_call.1} parent=5 // pred_fallthru
        _
      %p1047 = scmp.le.s32.totalorder 2, %s19
      // Predicated region
      $region61: #{tpu_custom_call.1} parent=5 // pred_check
        %p1048 = pneg %p1047
      $region62: #{tpu_custom_call.1} parent=5 // pred_check_branch
        %1050 = sbr.rel (%p1048) target = $region64
      $region63: #{tpu_custom_call.1} parent=5 // pred_region
        %s1051 = ssub.s32 %s19, 2
        // Predicated region
        $region65: #{tpu_custom_call.1} parent=63 // pred_check
          %p1052 = pneg %p179
        $region66: #{tpu_custom_call.1} parent=63 // pred_check_branch
          %1054 = sbr.rel (%p1052) target = $region68
        $region67: #{tpu_custom_call.1} parent=63 // pred_region
          %s1055 = sand.u32 %s164, 1
          %s1056 = scalar_lea.sflag [#allocation4], %s1055
          %s1057 = sand.u32 %s164, 1
          %s1058 = smul.addr %s1057, 16
          %s1059 = scalar_lea.vmem [#allocation8], %s1058
          %1060 = dma.done %s1056, 256
        $region68: #{tpu_custom_call.1} parent=63 // pred_fallthru
          _
      $region64: #{tpu_custom_call.1} parent=5 // pred_fallthru
        _
    $region6: #{tpu_custom_call.1} parent=1 // loop_footer
      %s23 = sadd.s32 1, %s19
    $region7: #{tpu_custom_call.1} parent=1 // loop_footer_branch
      %18 = sbr.rel target = $region3
    $region8: #{tpu_custom_call.1} parent=1 // loop_exit
      _
    %1061 = vsyncpa [#allocation3], 1
    %s1062 = scalar_lea.sflag [#allocation3], 1
    %1063 = vsyncpa %s1062, 1
    %1064 = vsyncpa [#allocation6], 1
    %1065 = vsyncpa [#allocation4], 1
    %s1066 = scalar_lea.sflag [#allocation4], 1
    %1067 = vsyncpa %s1066, 1

</llo_original>
